<compile_context>
chip_gen: v6e
topology: v6e:2x2x1
jax: 0.10.0
libtpu: 0.0.40
codegen_flags: <defaults>
</compile_context>

<pallas_src>
import jax
import jax.numpy as jnp
from jax.experimental import pallas as pl
from jax.experimental.pallas import tpu as pltpu


def _correlation_loss_kernel(idx_ref, a_hbm_ref, w_ref, out_ref, rows_ref, copy_sems):
    # idx_ref:   (L,)   int32  SMEM
    # a_hbm_ref: (V, V) f32    ANY/HBM (never loaded wholesale)
    # w_ref:     (Nw,)  f32    SMEM   (weight_tensor flattened, Nw = codebook_num - 1)
    # out_ref:   (2,)   f32    SMEM   [correlation_loss, weight_loss]
    # rows_ref:  (L, V) f32    VMEM scratch (gathered rows A[idx[i], :])
    # copy_sems: (L,)   DMA semaphores
    L, V = rows_ref.shape
    Nw = w_ref.shape[0]

    def row_copy(i):
        return pltpu.make_async_copy(
            a_hbm_ref.at[pl.ds(idx_ref[i], 1)],   # (1, V) row A[idx[i], :]
            rows_ref.at[pl.ds(i, 1)],
            copy_sems.at[i],
        )

    # 1) Kick off the L row-gather DMAs (L*V*4 bytes of HBM traffic, nothing else).
    for i in range(L):
        row_copy(i).start()

    # 2) While the DMAs are in flight, build
    #       M[i, v] = sum_{j < i} w[i-1-j] * (idx[j] == v)
    #    from SMEM scalars only.  V stays on the lane axis everywhere; no MXU, so the
    #    eventual selection of A's values is exact.
    lane_v = jax.lax.broadcasted_iota(jnp.int32, (1, V), 1)
    row_i = jax.lax.broadcasted_iota(jnp.int32, (L, 1), 0)
    m = jnp.zeros((L, V), jnp.float32)
    for j in range(L - 1):                      # columns j >= L-1 never receive weight
        onehot_j = (lane_v == idx_ref[j]).astype(jnp.float32)            # (1, V)
        coef_j = jnp.zeros((L, 1), jnp.float32)
        for k in range(L - 1 - j):              # k = i - 1 - j ; wrapper ensures k < Nw
            coef_j = coef_j + w_ref[k] * (row_i == (j + 1 + k)).astype(jnp.float32)
        m = m + coef_j * onehot_j                                         # (L,1)*(1,V)

    # 3) Weight loss: -5 * sum(min(w[k] - w[k+1], 0)); pure scalar-unit path.
    wl = jnp.float32(0.0)
    for k in range(Nw - 1):
        wl = wl + jnp.minimum(w_ref[k] - w_ref[k + 1], 0.0)
    out_ref[1] = -5.0 * wl

    # 4) Wait for the gathered rows, then fold and reduce:
    #       corr_sum = sum_{i,v} A[idx[i], v] * M[i, v]
    #                = sum_{i>j} A[idx[i], idx[j]] * w[i-1-j]
    for i in range(L):
        row_copy(i).wait()
    corr_sum = jnp.sum(rows_ref[...] * m)
    out_ref[0] = -corr_sum / float(L - 1)


def correlation_loss(distance_matrixA, codebook_num, index_ls, weight_tensor):
    """Returns (correlation_loss, weight_loss) as f32 scalars."""
    idx = jnp.asarray(index_ls, dtype=jnp.int32).reshape(-1)
    L = int(idx.shape[0])
    if L < 2:
        # The PyTorch reference would take a mean over an empty list here.
        raise ValueError("correlation_loss requires len(index_ls) >= 2")
    A = jnp.asarray(distance_matrixA, dtype=jnp.float32)
    V = int(A.shape[1])
    w = jnp.asarray(weight_tensor, dtype=jnp.float32).reshape(-1)   # (codebook_num - 1,)
    Nw = int(w.shape[0])
    if Nw != codebook_num - 1:
        raise ValueError("weight_tensor must have codebook_num - 1 entries")
    if L - 1 > Nw:
        # The PyTorch reference would index weight_tensor out of bounds here; refuse
        # instead of silently dropping subdiagonal terms.
        raise ValueError("len(index_ls) must be <= codebook_num")

    flops = 2 * L * L * V + 4 * L * V
    bytes_accessed = L * V * 4 + L * 4 + Nw * 4 + 2 * 4

    out = pl.pallas_call(
        _correlation_loss_kernel,
        out_shape=jax.ShapeDtypeStruct((2,), jnp.float32),
        in_specs=[
            pl.BlockSpec(memory_space=pltpu.MemorySpace.SMEM),   # idx (L,)
            pl.BlockSpec(memory_space=pl.ANY),                   # A (V, V) stays in HBM
            pl.BlockSpec(memory_space=pltpu.MemorySpace.SMEM),   # w (Nw,)
        ],
        out_specs=pl.BlockSpec(memory_space=pltpu.MemorySpace.SMEM),
        scratch_shapes=[
            pltpu.VMEM((L, V), jnp.float32),        # gathered rows
            pltpu.SemaphoreType.DMA((L,)),          # one DMA sem per row copy
        ],
        cost_estimate=pl.CostEstimate(flops=flops, transcendentals=0,
                                      bytes_accessed=bytes_accessed),
    )(idx, A, w)
    return out[0], out[1]


def _reference(A, codebook_num, idx, w):
    """Direct transcription of the PyTorch forward (pure JAX, python loops)."""
    L = len(idx)
    losses = []
    for i in range(1, L):
        s = jnp.float32(0.0)
        for j in range(i):
            s = s + A[idx[i], idx[j]] * w[0, i - 1 - j]
        losses.append(s)
    corr = -jnp.mean(jnp.stack(losses))
    diff = w[:, : codebook_num - 2] - w[:, 1:]
    diff = jnp.where(diff > 0, 0.0, diff) * 5.0
    wl = -jnp.sum(diff)
    return corr, wl


if __name__ == "__main__":
    key = jax.random.PRNGKey(0)
    k_a, k_w, k_i = jax.random.split(key, 3)

    codebook_num = 8      # N  -> weight_tensor has N-1 = 7 columns
    vocab = 128           # distance matrix is vocab x vocab
    L = codebook_num      # len(index_ls) (reference requires L <= codebook_num)

    distance_matrixA = jax.random.normal(k_a, (vocab, vocab), dtype=jnp.float32)
    weight_tensor = jax.random.normal(k_w, (1, codebook_num - 1), dtype=jnp.float32)
    index_ls = jax.random.randint(k_i, (L,), 0, vocab, dtype=jnp.int32)

    corr, wl = correlation_loss(distance_matrixA, codebook_num, index_ls, weight_tensor)
    jax.block_until_ready((corr, wl))

    idx_host = [int(x) for x in index_ls]
    corr_ref, wl_ref = _reference(distance_matrixA, codebook_num, idx_host, weight_tensor)

    assert jnp.allclose(corr, corr_ref, atol=1e-5, rtol=1e-5), (corr, corr_ref)
    assert jnp.allclose(wl, wl_ref, atol=1e-5, rtol=1e-5), (wl, wl_ref)
    print("KERNEL_OK")
</pallas_src>

<mosaic_0001>
module attributes {stable_mosaic.version = 11 : i64} {
  func.func @_correlation_loss_kernel(%arg0: memref<8xi32, #tpu.memory_space<smem>>, %arg1: memref<128x128xf32, #tpu.memory_space<any>>, %arg2: memref<7xf32, #tpu.memory_space<smem>>, %arg3: memref<2xf32, #tpu.memory_space<smem>>, %arg4: memref<8x128xf32, #tpu.memory_space<vmem>>, %arg5: memref<8x!tpu.dma_semaphore, #tpu.memory_space<semaphore_mem>>) attributes {dimension_semantics = [], scalar_prefetch = 0 : i64, scratch_operands = 2 : i64, tpu.core_type = #tpu.core_type<tc>} {
    %c0 = arith.constant 0 : index
    %0 = memref.load %arg0[%c0] : memref<8xi32, #tpu.memory_space<smem>>
    %c0_i32 = arith.constant 0 : i32
    %c0_i32_0 = arith.constant 0 : i32
    %1 = tpu.memref_slice %arg1[%0, %c0_i32_0] : memref<128x128xf32, #tpu.memory_space<any>> -> memref<1x128xf32, #tpu.memory_space<any>>
    %c0_i32_1 = arith.constant 0 : i32
    %c0_i32_2 = arith.constant 0 : i32
    %2 = tpu.memref_slice %arg4[%c0_i32_1, %c0_i32_2] : memref<8x128xf32, #tpu.memory_space<vmem>> -> memref<1x128xf32, #tpu.memory_space<vmem>>
    %3 = tpu.memref_slice %arg5[%c0_i32] : memref<8x!tpu.dma_semaphore, #tpu.memory_space<semaphore_mem>> -> memref<1x!tpu.dma_semaphore, #tpu.memory_space<semaphore_mem>>
    %4 = tpu.memref_squeeze %3 : memref<1x!tpu.dma_semaphore, #tpu.memory_space<semaphore_mem>> -> memref<!tpu.dma_semaphore, #tpu.memory_space<semaphore_mem>>
    tpu.enqueue_dma source(%1 : memref<1x128xf32, #tpu.memory_space<any>>) target(%2 : memref<1x128xf32, #tpu.memory_space<vmem>>) target_semaphore(%4 : memref<!tpu.dma_semaphore, #tpu.memory_space<semaphore_mem>>)
    %c1 = arith.constant 1 : index
    %5 = memref.load %arg0[%c1] : memref<8xi32, #tpu.memory_space<smem>>
    %c1_i32 = arith.constant 1 : i32
    %c0_i32_3 = arith.constant 0 : i32
    %6 = tpu.memref_slice %arg1[%5, %c0_i32_3] : memref<128x128xf32, #tpu.memory_space<any>> -> memref<1x128xf32, #tpu.memory_space<any>>
    %c1_i32_4 = arith.constant 1 : i32
    %c0_i32_5 = arith.constant 0 : i32
    %7 = tpu.memref_slice %arg4[%c1_i32_4, %c0_i32_5] : memref<8x128xf32, #tpu.memory_space<vmem>> -> memref<1x128xf32, #tpu.memory_space<vmem>>
    %8 = tpu.memref_slice %arg5[%c1_i32] : memref<8x!tpu.dma_semaphore, #tpu.memory_space<semaphore_mem>> -> memref<1x!tpu.dma_semaphore, #tpu.memory_space<semaphore_mem>>
    %9 = tpu.memref_squeeze %8 : memref<1x!tpu.dma_semaphore, #tpu.memory_space<semaphore_mem>> -> memref<!tpu.dma_semaphore, #tpu.memory_space<semaphore_mem>>
    tpu.enqueue_dma source(%6 : memref<1x128xf32, #tpu.memory_space<any>>) target(%7 : memref<1x128xf32, #tpu.memory_space<vmem>>) target_semaphore(%9 : memref<!tpu.dma_semaphore, #tpu.memory_space<semaphore_mem>>)
    %c2 = arith.constant 2 : index
    %10 = memref.load %arg0[%c2] : memref<8xi32, #tpu.memory_space<smem>>
    %c2_i32 = arith.constant 2 : i32
    %c0_i32_6 = arith.constant 0 : i32
    %11 = tpu.memref_slice %arg1[%10, %c0_i32_6] : memref<128x128xf32, #tpu.memory_space<any>> -> memref<1x128xf32, #tpu.memory_space<any>>
    %c2_i32_7 = arith.constant 2 : i32
    %c0_i32_8 = arith.constant 0 : i32
    %12 = tpu.memref_slice %arg4[%c2_i32_7, %c0_i32_8] : memref<8x128xf32, #tpu.memory_space<vmem>> -> memref<1x128xf32, #tpu.memory_space<vmem>>
    %13 = tpu.memref_slice %arg5[%c2_i32] : memref<8x!tpu.dma_semaphore, #tpu.memory_space<semaphore_mem>> -> memref<1x!tpu.dma_semaphore, #tpu.memory_space<semaphore_mem>>
    %14 = tpu.memref_squeeze %13 : memref<1x!tpu.dma_semaphore, #tpu.memory_space<semaphore_mem>> -> memref<!tpu.dma_semaphore, #tpu.memory_space<semaphore_mem>>
    tpu.enqueue_dma source(%11 : memref<1x128xf32, #tpu.memory_space<any>>) target(%12 : memref<1x128xf32, #tpu.memory_space<vmem>>) target_semaphore(%14 : memref<!tpu.dma_semaphore, #tpu.memory_space<semaphore_mem>>)
    %c3 = arith.constant 3 : index
    %15 = memref.load %arg0[%c3] : memref<8xi32, #tpu.memory_space<smem>>
    %c3_i32 = arith.constant 3 : i32
    %c0_i32_9 = arith.constant 0 : i32
    %16 = tpu.memref_slice %arg1[%15, %c0_i32_9] : memref<128x128xf32, #tpu.memory_space<any>> -> memref<1x128xf32, #tpu.memory_space<any>>
    %c3_i32_10 = arith.constant 3 : i32
    %c0_i32_11 = arith.constant 0 : i32
    %17 = tpu.memref_slice %arg4[%c3_i32_10, %c0_i32_11] : memref<8x128xf32, #tpu.memory_space<vmem>> -> memref<1x128xf32, #tpu.memory_space<vmem>>
    %18 = tpu.memref_slice %arg5[%c3_i32] : memref<8x!tpu.dma_semaphore, #tpu.memory_space<semaphore_mem>> -> memref<1x!tpu.dma_semaphore, #tpu.memory_space<semaphore_mem>>
    %19 = tpu.memref_squeeze %18 : memref<1x!tpu.dma_semaphore, #tpu.memory_space<semaphore_mem>> -> memref<!tpu.dma_semaphore, #tpu.memory_space<semaphore_mem>>
    tpu.enqueue_dma source(%16 : memref<1x128xf32, #tpu.memory_space<any>>) target(%17 : memref<1x128xf32, #tpu.memory_space<vmem>>) target_semaphore(%19 : memref<!tpu.dma_semaphore, #tpu.memory_space<semaphore_mem>>)
    %c4 = arith.constant 4 : index
    %20 = memref.load %arg0[%c4] : memref<8xi32, #tpu.memory_space<smem>>
    %c4_i32 = arith.constant 4 : i32
    %c0_i32_12 = arith.constant 0 : i32
    %21 = tpu.memref_slice %arg1[%20, %c0_i32_12] : memref<128x128xf32, #tpu.memory_space<any>> -> memref<1x128xf32, #tpu.memory_space<any>>
    %c4_i32_13 = arith.constant 4 : i32
    %c0_i32_14 = arith.constant 0 : i32
    %22 = tpu.memref_slice %arg4[%c4_i32_13, %c0_i32_14] : memref<8x128xf32, #tpu.memory_space<vmem>> -> memref<1x128xf32, #tpu.memory_space<vmem>>
    %23 = tpu.memref_slice %arg5[%c4_i32] : memref<8x!tpu.dma_semaphore, #tpu.memory_space<semaphore_mem>> -> memref<1x!tpu.dma_semaphore, #tpu.memory_space<semaphore_mem>>
    %24 = tpu.memref_squeeze %23 : memref<1x!tpu.dma_semaphore, #tpu.memory_space<semaphore_mem>> -> memref<!tpu.dma_semaphore, #tpu.memory_space<semaphore_mem>>
    tpu.enqueue_dma source(%21 : memref<1x128xf32, #tpu.memory_space<any>>) target(%22 : memref<1x128xf32, #tpu.memory_space<vmem>>) target_semaphore(%24 : memref<!tpu.dma_semaphore, #tpu.memory_space<semaphore_mem>>)
    %c5 = arith.constant 5 : index
    %25 = memref.load %arg0[%c5] : memref<8xi32, #tpu.memory_space<smem>>
    %c5_i32 = arith.constant 5 : i32
    %c0_i32_15 = arith.constant 0 : i32
    %26 = tpu.memref_slice %arg1[%25, %c0_i32_15] : memref<128x128xf32, #tpu.memory_space<any>> -> memref<1x128xf32, #tpu.memory_space<any>>
    %c5_i32_16 = arith.constant 5 : i32
    %c0_i32_17 = arith.constant 0 : i32
    %27 = tpu.memref_slice %arg4[%c5_i32_16, %c0_i32_17] : memref<8x128xf32, #tpu.memory_space<vmem>> -> memref<1x128xf32, #tpu.memory_space<vmem>>
    %28 = tpu.memref_slice %arg5[%c5_i32] : memref<8x!tpu.dma_semaphore, #tpu.memory_space<semaphore_mem>> -> memref<1x!tpu.dma_semaphore, #tpu.memory_space<semaphore_mem>>
    %29 = tpu.memref_squeeze %28 : memref<1x!tpu.dma_semaphore, #tpu.memory_space<semaphore_mem>> -> memref<!tpu.dma_semaphore, #tpu.memory_space<semaphore_mem>>
    tpu.enqueue_dma source(%26 : memref<1x128xf32, #tpu.memory_space<any>>) target(%27 : memref<1x128xf32, #tpu.memory_space<vmem>>) target_semaphore(%29 : memref<!tpu.dma_semaphore, #tpu.memory_space<semaphore_mem>>)
    %c6 = arith.constant 6 : index
    %30 = memref.load %arg0[%c6] : memref<8xi32, #tpu.memory_space<smem>>
    %c6_i32 = arith.constant 6 : i32
    %c0_i32_18 = arith.constant 0 : i32
    %31 = tpu.memref_slice %arg1[%30, %c0_i32_18] : memref<128x128xf32, #tpu.memory_space<any>> -> memref<1x128xf32, #tpu.memory_space<any>>
    %c6_i32_19 = arith.constant 6 : i32
    %c0_i32_20 = arith.constant 0 : i32
    %32 = tpu.memref_slice %arg4[%c6_i32_19, %c0_i32_20] : memref<8x128xf32, #tpu.memory_space<vmem>> -> memref<1x128xf32, #tpu.memory_space<vmem>>
    %33 = tpu.memref_slice %arg5[%c6_i32] : memref<8x!tpu.dma_semaphore, #tpu.memory_space<semaphore_mem>> -> memref<1x!tpu.dma_semaphore, #tpu.memory_space<semaphore_mem>>
    %34 = tpu.memref_squeeze %33 : memref<1x!tpu.dma_semaphore, #tpu.memory_space<semaphore_mem>> -> memref<!tpu.dma_semaphore, #tpu.memory_space<semaphore_mem>>
    tpu.enqueue_dma source(%31 : memref<1x128xf32, #tpu.memory_space<any>>) target(%32 : memref<1x128xf32, #tpu.memory_space<vmem>>) target_semaphore(%34 : memref<!tpu.dma_semaphore, #tpu.memory_space<semaphore_mem>>)
    %c7 = arith.constant 7 : index
    %35 = memref.load %arg0[%c7] : memref<8xi32, #tpu.memory_space<smem>>
    %c7_i32 = arith.constant 7 : i32
    %c0_i32_21 = arith.constant 0 : i32
    %36 = tpu.memref_slice %arg1[%35, %c0_i32_21] : memref<128x128xf32, #tpu.memory_space<any>> -> memref<1x128xf32, #tpu.memory_space<any>>
    %c7_i32_22 = arith.constant 7 : i32
    %c0_i32_23 = arith.constant 0 : i32
    %37 = tpu.memref_slice %arg4[%c7_i32_22, %c0_i32_23] : memref<8x128xf32, #tpu.memory_space<vmem>> -> memref<1x128xf32, #tpu.memory_space<vmem>>
    %38 = tpu.memref_slice %arg5[%c7_i32] : memref<8x!tpu.dma_semaphore, #tpu.memory_space<semaphore_mem>> -> memref<1x!tpu.dma_semaphore, #tpu.memory_space<semaphore_mem>>
    %39 = tpu.memref_squeeze %38 : memref<1x!tpu.dma_semaphore, #tpu.memory_space<semaphore_mem>> -> memref<!tpu.dma_semaphore, #tpu.memory_space<semaphore_mem>>
    tpu.enqueue_dma source(%36 : memref<1x128xf32, #tpu.memory_space<any>>) target(%37 : memref<1x128xf32, #tpu.memory_space<vmem>>) target_semaphore(%39 : memref<!tpu.dma_semaphore, #tpu.memory_space<semaphore_mem>>)
    %40 = tpu.iota {dimensions = array<i32: 1>} : vector<1x128xi32>
    %41 = tpu.iota {dimensions = array<i32: 0>} : vector<8x1xi32>
    %cst = arith.constant 0.000000e+00 : f32
    %42 = vector.broadcast %cst : f32 to vector<8x128xf32>
    %c0_24 = arith.constant 0 : index
    %43 = memref.load %arg0[%c0_24] : memref<8xi32, #tpu.memory_space<smem>>
    %44 = vector.broadcast %43 : i32 to vector<1x128xi32>
    %45 = arith.cmpi eq, %40, %44 : vector<1x128xi32>
    %46 = arith.extui %45 : vector<1x128xi1> to vector<1x128xi32>
    %47 = arith.sitofp %46 : vector<1x128xi32> to vector<1x128xf32>
    %cst_25 = arith.constant 0.000000e+00 : f32
    %48 = vector.broadcast %cst_25 : f32 to vector<8x1xf32>
    %c0_26 = arith.constant 0 : index
    %49 = memref.load %arg2[%c0_26] : memref<7xf32, #tpu.memory_space<smem>>
    %c1_i32_27 = arith.constant 1 : i32
    %50 = vector.broadcast %c1_i32_27 : i32 to vector<8x1xi32>
    %51 = arith.cmpi eq, %41, %50 : vector<8x1xi32>
    %52 = arith.extui %51 : vector<8x1xi1> to vector<8x1xi32>
    %53 = arith.sitofp %52 : vector<8x1xi32> to vector<8x1xf32>
    %54 = vector.broadcast %49 : f32 to vector<8x1xf32>
    %55 = arith.mulf %54, %53 : vector<8x1xf32>
    %56 = arith.addf %48, %55 : vector<8x1xf32>
    %c1_28 = arith.constant 1 : index
    %57 = memref.load %arg2[%c1_28] : memref<7xf32, #tpu.memory_space<smem>>
    %c2_i32_29 = arith.constant 2 : i32
    %58 = vector.broadcast %c2_i32_29 : i32 to vector<8x1xi32>
    %59 = arith.cmpi eq, %41, %58 : vector<8x1xi32>
    %60 = arith.extui %59 : vector<8x1xi1> to vector<8x1xi32>
    %61 = arith.sitofp %60 : vector<8x1xi32> to vector<8x1xf32>
    %62 = vector.broadcast %57 : f32 to vector<8x1xf32>
    %63 = arith.mulf %62, %61 : vector<8x1xf32>
    %64 = arith.addf %56, %63 : vector<8x1xf32>
    %c2_30 = arith.constant 2 : index
    %65 = memref.load %arg2[%c2_30] : memref<7xf32, #tpu.memory_space<smem>>
    %c3_i32_31 = arith.constant 3 : i32
    %66 = vector.broadcast %c3_i32_31 : i32 to vector<8x1xi32>
    %67 = arith.cmpi eq, %41, %66 : vector<8x1xi32>
    %68 = arith.extui %67 : vector<8x1xi1> to vector<8x1xi32>
    %69 = arith.sitofp %68 : vector<8x1xi32> to vector<8x1xf32>
    %70 = vector.broadcast %65 : f32 to vector<8x1xf32>
    %71 = arith.mulf %70, %69 : vector<8x1xf32>
    %72 = arith.addf %64, %71 : vector<8x1xf32>
    %c3_32 = arith.constant 3 : index
    %73 = memref.load %arg2[%c3_32] : memref<7xf32, #tpu.memory_space<smem>>
    %c4_i32_33 = arith.constant 4 : i32
    %74 = vector.broadcast %c4_i32_33 : i32 to vector<8x1xi32>
    %75 = arith.cmpi eq, %41, %74 : vector<8x1xi32>
    %76 = arith.extui %75 : vector<8x1xi1> to vector<8x1xi32>
    %77 = arith.sitofp %76 : vector<8x1xi32> to vector<8x1xf32>
    %78 = vector.broadcast %73 : f32 to vector<8x1xf32>
    %79 = arith.mulf %78, %77 : vector<8x1xf32>
    %80 = arith.addf %72, %79 : vector<8x1xf32>
    %c4_34 = arith.constant 4 : index
    %81 = memref.load %arg2[%c4_34] : memref<7xf32, #tpu.memory_space<smem>>
    %c5_i32_35 = arith.constant 5 : i32
    %82 = vector.broadcast %c5_i32_35 : i32 to vector<8x1xi32>
    %83 = arith.cmpi eq, %41, %82 : vector<8x1xi32>
    %84 = arith.extui %83 : vector<8x1xi1> to vector<8x1xi32>
    %85 = arith.sitofp %84 : vector<8x1xi32> to vector<8x1xf32>
    %86 = vector.broadcast %81 : f32 to vector<8x1xf32>
    %87 = arith.mulf %86, %85 : vector<8x1xf32>
    %88 = arith.addf %80, %87 : vector<8x1xf32>
    %c5_36 = arith.constant 5 : index
    %89 = memref.load %arg2[%c5_36] : memref<7xf32, #tpu.memory_space<smem>>
    %c6_i32_37 = arith.constant 6 : i32
    %90 = vector.broadcast %c6_i32_37 : i32 to vector<8x1xi32>
    %91 = arith.cmpi eq, %41, %90 : vector<8x1xi32>
    %92 = arith.extui %91 : vector<8x1xi1> to vector<8x1xi32>
    %93 = arith.sitofp %92 : vector<8x1xi32> to vector<8x1xf32>
    %94 = vector.broadcast %89 : f32 to vector<8x1xf32>
    %95 = arith.mulf %94, %93 : vector<8x1xf32>
    %96 = arith.addf %88, %95 : vector<8x1xf32>
    %c6_38 = arith.constant 6 : index
    %97 = memref.load %arg2[%c6_38] : memref<7xf32, #tpu.memory_space<smem>>
    %c7_i32_39 = arith.constant 7 : i32
    %98 = vector.broadcast %c7_i32_39 : i32 to vector<8x1xi32>
    %99 = arith.cmpi eq, %41, %98 : vector<8x1xi32>
    %100 = arith.extui %99 : vector<8x1xi1> to vector<8x1xi32>
    %101 = arith.sitofp %100 : vector<8x1xi32> to vector<8x1xf32>
    %102 = vector.broadcast %97 : f32 to vector<8x1xf32>
    %103 = arith.mulf %102, %101 : vector<8x1xf32>
    %104 = arith.addf %96, %103 : vector<8x1xf32>
    %105 = vector.broadcast %104 : vector<8x1xf32> to vector<8x128xf32>
    %106 = vector.broadcast %47 : vector<1x128xf32> to vector<8x128xf32>
    %107 = arith.mulf %105, %106 : vector<8x128xf32>
    %108 = arith.addf %42, %107 : vector<8x128xf32>
    %c1_40 = arith.constant 1 : index
    %109 = memref.load %arg0[%c1_40] : memref<8xi32, #tpu.memory_space<smem>>
    %110 = vector.broadcast %109 : i32 to vector<1x128xi32>
    %111 = arith.cmpi eq, %40, %110 : vector<1x128xi32>
    %112 = arith.extui %111 : vector<1x128xi1> to vector<1x128xi32>
    %113 = arith.sitofp %112 : vector<1x128xi32> to vector<1x128xf32>
    %cst_41 = arith.constant 0.000000e+00 : f32
    %114 = vector.broadcast %cst_41 : f32 to vector<8x1xf32>
    %c0_42 = arith.constant 0 : index
    %115 = memref.load %arg2[%c0_42] : memref<7xf32, #tpu.memory_space<smem>>
    %c2_i32_43 = arith.constant 2 : i32
    %116 = vector.broadcast %c2_i32_43 : i32 to vector<8x1xi32>
    %117 = arith.cmpi eq, %41, %116 : vector<8x1xi32>
    %118 = arith.extui %117 : vector<8x1xi1> to vector<8x1xi32>
    %119 = arith.sitofp %118 : vector<8x1xi32> to vector<8x1xf32>
    %120 = vector.broadcast %115 : f32 to vector<8x1xf32>
    %121 = arith.mulf %120, %119 : vector<8x1xf32>
    %122 = arith.addf %114, %121 : vector<8x1xf32>
    %c1_44 = arith.constant 1 : index
    %123 = memref.load %arg2[%c1_44] : memref<7xf32, #tpu.memory_space<smem>>
    %c3_i32_45 = arith.constant 3 : i32
    %124 = vector.broadcast %c3_i32_45 : i32 to vector<8x1xi32>
    %125 = arith.cmpi eq, %41, %124 : vector<8x1xi32>
    %126 = arith.extui %125 : vector<8x1xi1> to vector<8x1xi32>
    %127 = arith.sitofp %126 : vector<8x1xi32> to vector<8x1xf32>
    %128 = vector.broadcast %123 : f32 to vector<8x1xf32>
    %129 = arith.mulf %128, %127 : vector<8x1xf32>
    %130 = arith.addf %122, %129 : vector<8x1xf32>
    %c2_46 = arith.constant 2 : index
    %131 = memref.load %arg2[%c2_46] : memref<7xf32, #tpu.memory_space<smem>>
    %c4_i32_47 = arith.constant 4 : i32
    %132 = vector.broadcast %c4_i32_47 : i32 to vector<8x1xi32>
    %133 = arith.cmpi eq, %41, %132 : vector<8x1xi32>
    %134 = arith.extui %133 : vector<8x1xi1> to vector<8x1xi32>
    %135 = arith.sitofp %134 : vector<8x1xi32> to vector<8x1xf32>
    %136 = vector.broadcast %131 : f32 to vector<8x1xf32>
    %137 = arith.mulf %136, %135 : vector<8x1xf32>
    %138 = arith.addf %130, %137 : vector<8x1xf32>
    %c3_48 = arith.constant 3 : index
    %139 = memref.load %arg2[%c3_48] : memref<7xf32, #tpu.memory_space<smem>>
    %c5_i32_49 = arith.constant 5 : i32
    %140 = vector.broadcast %c5_i32_49 : i32 to vector<8x1xi32>
    %141 = arith.cmpi eq, %41, %140 : vector<8x1xi32>
    %142 = arith.extui %141 : vector<8x1xi1> to vector<8x1xi32>
    %143 = arith.sitofp %142 : vector<8x1xi32> to vector<8x1xf32>
    %144 = vector.broadcast %139 : f32 to vector<8x1xf32>
    %145 = arith.mulf %144, %143 : vector<8x1xf32>
    %146 = arith.addf %138, %145 : vector<8x1xf32>
    %c4_50 = arith.constant 4 : index
    %147 = memref.load %arg2[%c4_50] : memref<7xf32, #tpu.memory_space<smem>>
    %c6_i32_51 = arith.constant 6 : i32
    %148 = vector.broadcast %c6_i32_51 : i32 to vector<8x1xi32>
    %149 = arith.cmpi eq, %41, %148 : vector<8x1xi32>
    %150 = arith.extui %149 : vector<8x1xi1> to vector<8x1xi32>
    %151 = arith.sitofp %150 : vector<8x1xi32> to vector<8x1xf32>
    %152 = vector.broadcast %147 : f32 to vector<8x1xf32>
    %153 = arith.mulf %152, %151 : vector<8x1xf32>
    %154 = arith.addf %146, %153 : vector<8x1xf32>
    %c5_52 = arith.constant 5 : index
    %155 = memref.load %arg2[%c5_52] : memref<7xf32, #tpu.memory_space<smem>>
    %c7_i32_53 = arith.constant 7 : i32
    %156 = vector.broadcast %c7_i32_53 : i32 to vector<8x1xi32>
    %157 = arith.cmpi eq, %41, %156 : vector<8x1xi32>
    %158 = arith.extui %157 : vector<8x1xi1> to vector<8x1xi32>
    %159 = arith.sitofp %158 : vector<8x1xi32> to vector<8x1xf32>
    %160 = vector.broadcast %155 : f32 to vector<8x1xf32>
    %161 = arith.mulf %160, %159 : vector<8x1xf32>
    %162 = arith.addf %154, %161 : vector<8x1xf32>
    %163 = vector.broadcast %162 : vector<8x1xf32> to vector<8x128xf32>
    %164 = vector.broadcast %113 : vector<1x128xf32> to vector<8x128xf32>
    %165 = arith.mulf %163, %164 : vector<8x128xf32>
    %166 = arith.addf %108, %165 : vector<8x128xf32>
    %c2_54 = arith.constant 2 : index
    %167 = memref.load %arg0[%c2_54] : memref<8xi32, #tpu.memory_space<smem>>
    %168 = vector.broadcast %167 : i32 to vector<1x128xi32>
    %169 = arith.cmpi eq, %40, %168 : vector<1x128xi32>
    %170 = arith.extui %169 : vector<1x128xi1> to vector<1x128xi32>
    %171 = arith.sitofp %170 : vector<1x128xi32> to vector<1x128xf32>
    %cst_55 = arith.constant 0.000000e+00 : f32
    %172 = vector.broadcast %cst_55 : f32 to vector<8x1xf32>
    %c0_56 = arith.constant 0 : index
    %173 = memref.load %arg2[%c0_56] : memref<7xf32, #tpu.memory_space<smem>>
    %c3_i32_57 = arith.constant 3 : i32
    %174 = vector.broadcast %c3_i32_57 : i32 to vector<8x1xi32>
    %175 = arith.cmpi eq, %41, %174 : vector<8x1xi32>
    %176 = arith.extui %175 : vector<8x1xi1> to vector<8x1xi32>
    %177 = arith.sitofp %176 : vector<8x1xi32> to vector<8x1xf32>
    %178 = vector.broadcast %173 : f32 to vector<8x1xf32>
    %179 = arith.mulf %178, %177 : vector<8x1xf32>
    %180 = arith.addf %172, %179 : vector<8x1xf32>
    %c1_58 = arith.constant 1 : index
    %181 = memref.load %arg2[%c1_58] : memref<7xf32, #tpu.memory_space<smem>>
    %c4_i32_59 = arith.constant 4 : i32
    %182 = vector.broadcast %c4_i32_59 : i32 to vector<8x1xi32>
    %183 = arith.cmpi eq, %41, %182 : vector<8x1xi32>
    %184 = arith.extui %183 : vector<8x1xi1> to vector<8x1xi32>
    %185 = arith.sitofp %184 : vector<8x1xi32> to vector<8x1xf32>
    %186 = vector.broadcast %181 : f32 to vector<8x1xf32>
    %187 = arith.mulf %186, %185 : vector<8x1xf32>
    %188 = arith.addf %180, %187 : vector<8x1xf32>
    %c2_60 = arith.constant 2 : index
    %189 = memref.load %arg2[%c2_60] : memref<7xf32, #tpu.memory_space<smem>>
    %c5_i32_61 = arith.constant 5 : i32
    %190 = vector.broadcast %c5_i32_61 : i32 to vector<8x1xi32>
    %191 = arith.cmpi eq, %41, %190 : vector<8x1xi32>
    %192 = arith.extui %191 : vector<8x1xi1> to vector<8x1xi32>
    %193 = arith.sitofp %192 : vector<8x1xi32> to vector<8x1xf32>
    %194 = vector.broadcast %189 : f32 to vector<8x1xf32>
    %195 = arith.mulf %194, %193 : vector<8x1xf32>
    %196 = arith.addf %188, %195 : vector<8x1xf32>
    %c3_62 = arith.constant 3 : index
    %197 = memref.load %arg2[%c3_62] : memref<7xf32, #tpu.memory_space<smem>>
    %c6_i32_63 = arith.constant 6 : i32
    %198 = vector.broadcast %c6_i32_63 : i32 to vector<8x1xi32>
    %199 = arith.cmpi eq, %41, %198 : vector<8x1xi32>
    %200 = arith.extui %199 : vector<8x1xi1> to vector<8x1xi32>
    %201 = arith.sitofp %200 : vector<8x1xi32> to vector<8x1xf32>
    %202 = vector.broadcast %197 : f32 to vector<8x1xf32>
    %203 = arith.mulf %202, %201 : vector<8x1xf32>
    %204 = arith.addf %196, %203 : vector<8x1xf32>
    %c4_64 = arith.constant 4 : index
    %205 = memref.load %arg2[%c4_64] : memref<7xf32, #tpu.memory_space<smem>>
    %c7_i32_65 = arith.constant 7 : i32
    %206 = vector.broadcast %c7_i32_65 : i32 to vector<8x1xi32>
    %207 = arith.cmpi eq, %41, %206 : vector<8x1xi32>
    %208 = arith.extui %207 : vector<8x1xi1> to vector<8x1xi32>
    %209 = arith.sitofp %208 : vector<8x1xi32> to vector<8x1xf32>
    %210 = vector.broadcast %205 : f32 to vector<8x1xf32>
    %211 = arith.mulf %210, %209 : vector<8x1xf32>
    %212 = arith.addf %204, %211 : vector<8x1xf32>
    %213 = vector.broadcast %212 : vector<8x1xf32> to vector<8x128xf32>
    %214 = vector.broadcast %171 : vector<1x128xf32> to vector<8x128xf32>
    %215 = arith.mulf %213, %214 : vector<8x128xf32>
    %216 = arith.addf %166, %215 : vector<8x128xf32>
    %c3_66 = arith.constant 3 : index
    %217 = memref.load %arg0[%c3_66] : memref<8xi32, #tpu.memory_space<smem>>
    %218 = vector.broadcast %217 : i32 to vector<1x128xi32>
    %219 = arith.cmpi eq, %40, %218 : vector<1x128xi32>
    %220 = arith.extui %219 : vector<1x128xi1> to vector<1x128xi32>
    %221 = arith.sitofp %220 : vector<1x128xi32> to vector<1x128xf32>
    %cst_67 = arith.constant 0.000000e+00 : f32
    %222 = vector.broadcast %cst_67 : f32 to vector<8x1xf32>
    %c0_68 = arith.constant 0 : index
    %223 = memref.load %arg2[%c0_68] : memref<7xf32, #tpu.memory_space<smem>>
    %c4_i32_69 = arith.constant 4 : i32
    %224 = vector.broadcast %c4_i32_69 : i32 to vector<8x1xi32>
    %225 = arith.cmpi eq, %41, %224 : vector<8x1xi32>
    %226 = arith.extui %225 : vector<8x1xi1> to vector<8x1xi32>
    %227 = arith.sitofp %226 : vector<8x1xi32> to vector<8x1xf32>
    %228 = vector.broadcast %223 : f32 to vector<8x1xf32>
    %229 = arith.mulf %228, %227 : vector<8x1xf32>
    %230 = arith.addf %222, %229 : vector<8x1xf32>
    %c1_70 = arith.constant 1 : index
    %231 = memref.load %arg2[%c1_70] : memref<7xf32, #tpu.memory_space<smem>>
    %c5_i32_71 = arith.constant 5 : i32
    %232 = vector.broadcast %c5_i32_71 : i32 to vector<8x1xi32>
    %233 = arith.cmpi eq, %41, %232 : vector<8x1xi32>
    %234 = arith.extui %233 : vector<8x1xi1> to vector<8x1xi32>
    %235 = arith.sitofp %234 : vector<8x1xi32> to vector<8x1xf32>
    %236 = vector.broadcast %231 : f32 to vector<8x1xf32>
    %237 = arith.mulf %236, %235 : vector<8x1xf32>
    %238 = arith.addf %230, %237 : vector<8x1xf32>
    %c2_72 = arith.constant 2 : index
    %239 = memref.load %arg2[%c2_72] : memref<7xf32, #tpu.memory_space<smem>>
    %c6_i32_73 = arith.constant 6 : i32
    %240 = vector.broadcast %c6_i32_73 : i32 to vector<8x1xi32>
    %241 = arith.cmpi eq, %41, %240 : vector<8x1xi32>
    %242 = arith.extui %241 : vector<8x1xi1> to vector<8x1xi32>
    %243 = arith.sitofp %242 : vector<8x1xi32> to vector<8x1xf32>
    %244 = vector.broadcast %239 : f32 to vector<8x1xf32>
    %245 = arith.mulf %244, %243 : vector<8x1xf32>
    %246 = arith.addf %238, %245 : vector<8x1xf32>
    %c3_74 = arith.constant 3 : index
    %247 = memref.load %arg2[%c3_74] : memref<7xf32, #tpu.memory_space<smem>>
    %c7_i32_75 = arith.constant 7 : i32
    %248 = vector.broadcast %c7_i32_75 : i32 to vector<8x1xi32>
    %249 = arith.cmpi eq, %41, %248 : vector<8x1xi32>
    %250 = arith.extui %249 : vector<8x1xi1> to vector<8x1xi32>
    %251 = arith.sitofp %250 : vector<8x1xi32> to vector<8x1xf32>
    %252 = vector.broadcast %247 : f32 to vector<8x1xf32>
    %253 = arith.mulf %252, %251 : vector<8x1xf32>
    %254 = arith.addf %246, %253 : vector<8x1xf32>
    %255 = vector.broadcast %254 : vector<8x1xf32> to vector<8x128xf32>
    %256 = vector.broadcast %221 : vector<1x128xf32> to vector<8x128xf32>
    %257 = arith.mulf %255, %256 : vector<8x128xf32>
    %258 = arith.addf %216, %257 : vector<8x128xf32>
    %c4_76 = arith.constant 4 : index
    %259 = memref.load %arg0[%c4_76] : memref<8xi32, #tpu.memory_space<smem>>
    %260 = vector.broadcast %259 : i32 to vector<1x128xi32>
    %261 = arith.cmpi eq, %40, %260 : vector<1x128xi32>
    %262 = arith.extui %261 : vector<1x128xi1> to vector<1x128xi32>
    %263 = arith.sitofp %262 : vector<1x128xi32> to vector<1x128xf32>
    %cst_77 = arith.constant 0.000000e+00 : f32
    %264 = vector.broadcast %cst_77 : f32 to vector<8x1xf32>
    %c0_78 = arith.constant 0 : index
    %265 = memref.load %arg2[%c0_78] : memref<7xf32, #tpu.memory_space<smem>>
    %c5_i32_79 = arith.constant 5 : i32
    %266 = vector.broadcast %c5_i32_79 : i32 to vector<8x1xi32>
    %267 = arith.cmpi eq, %41, %266 : vector<8x1xi32>
    %268 = arith.extui %267 : vector<8x1xi1> to vector<8x1xi32>
    %269 = arith.sitofp %268 : vector<8x1xi32> to vector<8x1xf32>
    %270 = vector.broadcast %265 : f32 to vector<8x1xf32>
    %271 = arith.mulf %270, %269 : vector<8x1xf32>
    %272 = arith.addf %264, %271 : vector<8x1xf32>
    %c1_80 = arith.constant 1 : index
    %273 = memref.load %arg2[%c1_80] : memref<7xf32, #tpu.memory_space<smem>>
    %c6_i32_81 = arith.constant 6 : i32
    %274 = vector.broadcast %c6_i32_81 : i32 to vector<8x1xi32>
    %275 = arith.cmpi eq, %41, %274 : vector<8x1xi32>
    %276 = arith.extui %275 : vector<8x1xi1> to vector<8x1xi32>
    %277 = arith.sitofp %276 : vector<8x1xi32> to vector<8x1xf32>
    %278 = vector.broadcast %273 : f32 to vector<8x1xf32>
    %279 = arith.mulf %278, %277 : vector<8x1xf32>
    %280 = arith.addf %272, %279 : vector<8x1xf32>
    %c2_82 = arith.constant 2 : index
    %281 = memref.load %arg2[%c2_82] : memref<7xf32, #tpu.memory_space<smem>>
    %c7_i32_83 = arith.constant 7 : i32
    %282 = vector.broadcast %c7_i32_83 : i32 to vector<8x1xi32>
    %283 = arith.cmpi eq, %41, %282 : vector<8x1xi32>
    %284 = arith.extui %283 : vector<8x1xi1> to vector<8x1xi32>
    %285 = arith.sitofp %284 : vector<8x1xi32> to vector<8x1xf32>
    %286 = vector.broadcast %281 : f32 to vector<8x1xf32>
    %287 = arith.mulf %286, %285 : vector<8x1xf32>
    %288 = arith.addf %280, %287 : vector<8x1xf32>
    %289 = vector.broadcast %288 : vector<8x1xf32> to vector<8x128xf32>
    %290 = vector.broadcast %263 : vector<1x128xf32> to vector<8x128xf32>
    %291 = arith.mulf %289, %290 : vector<8x128xf32>
    %292 = arith.addf %258, %291 : vector<8x128xf32>
    %c5_84 = arith.constant 5 : index
    %293 = memref.load %arg0[%c5_84] : memref<8xi32, #tpu.memory_space<smem>>
    %294 = vector.broadcast %293 : i32 to vector<1x128xi32>
    %295 = arith.cmpi eq, %40, %294 : vector<1x128xi32>
    %296 = arith.extui %295 : vector<1x128xi1> to vector<1x128xi32>
    %297 = arith.sitofp %296 : vector<1x128xi32> to vector<1x128xf32>
    %cst_85 = arith.constant 0.000000e+00 : f32
    %298 = vector.broadcast %cst_85 : f32 to vector<8x1xf32>
    %c0_86 = arith.constant 0 : index
    %299 = memref.load %arg2[%c0_86] : memref<7xf32, #tpu.memory_space<smem>>
    %c6_i32_87 = arith.constant 6 : i32
    %300 = vector.broadcast %c6_i32_87 : i32 to vector<8x1xi32>
    %301 = arith.cmpi eq, %41, %300 : vector<8x1xi32>
    %302 = arith.extui %301 : vector<8x1xi1> to vector<8x1xi32>
    %303 = arith.sitofp %302 : vector<8x1xi32> to vector<8x1xf32>
    %304 = vector.broadcast %299 : f32 to vector<8x1xf32>
    %305 = arith.mulf %304, %303 : vector<8x1xf32>
    %306 = arith.addf %298, %305 : vector<8x1xf32>
    %c1_88 = arith.constant 1 : index
    %307 = memref.load %arg2[%c1_88] : memref<7xf32, #tpu.memory_space<smem>>
    %c7_i32_89 = arith.constant 7 : i32
    %308 = vector.broadcast %c7_i32_89 : i32 to vector<8x1xi32>
    %309 = arith.cmpi eq, %41, %308 : vector<8x1xi32>
    %310 = arith.extui %309 : vector<8x1xi1> to vector<8x1xi32>
    %311 = arith.sitofp %310 : vector<8x1xi32> to vector<8x1xf32>
    %312 = vector.broadcast %307 : f32 to vector<8x1xf32>
    %313 = arith.mulf %312, %311 : vector<8x1xf32>
    %314 = arith.addf %306, %313 : vector<8x1xf32>
    %315 = vector.broadcast %314 : vector<8x1xf32> to vector<8x128xf32>
    %316 = vector.broadcast %297 : vector<1x128xf32> to vector<8x128xf32>
    %317 = arith.mulf %315, %316 : vector<8x128xf32>
    %318 = arith.addf %292, %317 : vector<8x128xf32>
    %c6_90 = arith.constant 6 : index
    %319 = memref.load %arg0[%c6_90] : memref<8xi32, #tpu.memory_space<smem>>
    %320 = vector.broadcast %319 : i32 to vector<1x128xi32>
    %321 = arith.cmpi eq, %40, %320 : vector<1x128xi32>
    %322 = arith.extui %321 : vector<1x128xi1> to vector<1x128xi32>
    %323 = arith.sitofp %322 : vector<1x128xi32> to vector<1x128xf32>
    %cst_91 = arith.constant 0.000000e+00 : f32
    %324 = vector.broadcast %cst_91 : f32 to vector<8x1xf32>
    %c0_92 = arith.constant 0 : index
    %325 = memref.load %arg2[%c0_92] : memref<7xf32, #tpu.memory_space<smem>>
    %c7_i32_93 = arith.constant 7 : i32
    %326 = vector.broadcast %c7_i32_93 : i32 to vector<8x1xi32>
    %327 = arith.cmpi eq, %41, %326 : vector<8x1xi32>
    %328 = arith.extui %327 : vector<8x1xi1> to vector<8x1xi32>
    %329 = arith.sitofp %328 : vector<8x1xi32> to vector<8x1xf32>
    %330 = vector.broadcast %325 : f32 to vector<8x1xf32>
    %331 = arith.mulf %330, %329 : vector<8x1xf32>
    %332 = arith.addf %324, %331 : vector<8x1xf32>
    %333 = vector.broadcast %332 : vector<8x1xf32> to vector<8x128xf32>
    %334 = vector.broadcast %323 : vector<1x128xf32> to vector<8x128xf32>
    %335 = arith.mulf %333, %334 : vector<8x128xf32>
    %336 = arith.addf %318, %335 : vector<8x128xf32>
    %c0_94 = arith.constant 0 : index
    %337 = memref.load %arg2[%c0_94] : memref<7xf32, #tpu.memory_space<smem>>
    %c1_95 = arith.constant 1 : index
    %338 = memref.load %arg2[%c1_95] : memref<7xf32, #tpu.memory_space<smem>>
    %339 = arith.subf %337, %338 : f32
    %cst_96 = arith.constant 0.000000e+00 : f32
    %340 = arith.minimumf %339, %cst_96 : f32
    %cst_97 = arith.constant 0.000000e+00 : f32
    %341 = arith.addf %cst_97, %340 : f32
    %c1_98 = arith.constant 1 : index
    %342 = memref.load %arg2[%c1_98] : memref<7xf32, #tpu.memory_space<smem>>
    %c2_99 = arith.constant 2 : index
    %343 = memref.load %arg2[%c2_99] : memref<7xf32, #tpu.memory_space<smem>>
    %344 = arith.subf %342, %343 : f32
    %cst_100 = arith.constant 0.000000e+00 : f32
    %345 = arith.minimumf %344, %cst_100 : f32
    %346 = arith.addf %341, %345 : f32
    %c2_101 = arith.constant 2 : index
    %347 = memref.load %arg2[%c2_101] : memref<7xf32, #tpu.memory_space<smem>>
    %c3_102 = arith.constant 3 : index
    %348 = memref.load %arg2[%c3_102] : memref<7xf32, #tpu.memory_space<smem>>
    %349 = arith.subf %347, %348 : f32
    %cst_103 = arith.constant 0.000000e+00 : f32
    %350 = arith.minimumf %349, %cst_103 : f32
    %351 = arith.addf %346, %350 : f32
    %c3_104 = arith.constant 3 : index
    %352 = memref.load %arg2[%c3_104] : memref<7xf32, #tpu.memory_space<smem>>
    %c4_105 = arith.constant 4 : index
    %353 = memref.load %arg2[%c4_105] : memref<7xf32, #tpu.memory_space<smem>>
    %354 = arith.subf %352, %353 : f32
    %cst_106 = arith.constant 0.000000e+00 : f32
    %355 = arith.minimumf %354, %cst_106 : f32
    %356 = arith.addf %351, %355 : f32
    %c4_107 = arith.constant 4 : index
    %357 = memref.load %arg2[%c4_107] : memref<7xf32, #tpu.memory_space<smem>>
    %c5_108 = arith.constant 5 : index
    %358 = memref.load %arg2[%c5_108] : memref<7xf32, #tpu.memory_space<smem>>
    %359 = arith.subf %357, %358 : f32
    %cst_109 = arith.constant 0.000000e+00 : f32
    %360 = arith.minimumf %359, %cst_109 : f32
    %361 = arith.addf %356, %360 : f32
    %c5_110 = arith.constant 5 : index
    %362 = memref.load %arg2[%c5_110] : memref<7xf32, #tpu.memory_space<smem>>
    %c6_111 = arith.constant 6 : index
    %363 = memref.load %arg2[%c6_111] : memref<7xf32, #tpu.memory_space<smem>>
    %364 = arith.subf %362, %363 : f32
    %cst_112 = arith.constant 0.000000e+00 : f32
    %365 = arith.minimumf %364, %cst_112 : f32
    %366 = arith.addf %361, %365 : f32
    %cst_113 = arith.constant -5.000000e+00 : f32
    %367 = arith.mulf %cst_113, %366 : f32
    %c1_114 = arith.constant 1 : index
    %368 = memref.load %arg3[%c1_114] : memref<2xf32, #tpu.memory_space<smem>>
    memref.store %367, %arg3[%c1_114] : memref<2xf32, #tpu.memory_space<smem>>
    %c0_115 = arith.constant 0 : index
    %369 = memref.load %arg0[%c0_115] : memref<8xi32, #tpu.memory_space<smem>>
    %c0_i32_116 = arith.constant 0 : i32
    %c0_i32_117 = arith.constant 0 : i32
    %370 = tpu.memref_slice %arg1[%369, %c0_i32_117] : memref<128x128xf32, #tpu.memory_space<any>> -> memref<1x128xf32, #tpu.memory_space<any>>
    %c0_i32_118 = arith.constant 0 : i32
    %c0_i32_119 = arith.constant 0 : i32
    %371 = tpu.memref_slice %arg4[%c0_i32_118, %c0_i32_119] : memref<8x128xf32, #tpu.memory_space<vmem>> -> memref<1x128xf32, #tpu.memory_space<vmem>>
    %372 = tpu.memref_slice %arg5[%c0_i32_116] : memref<8x!tpu.dma_semaphore, #tpu.memory_space<semaphore_mem>> -> memref<1x!tpu.dma_semaphore, #tpu.memory_space<semaphore_mem>>
    %373 = tpu.memref_squeeze %372 : memref<1x!tpu.dma_semaphore, #tpu.memory_space<semaphore_mem>> -> memref<!tpu.dma_semaphore, #tpu.memory_space<semaphore_mem>>
    tpu.wait_dma2 semaphore(%373 : memref<!tpu.dma_semaphore, #tpu.memory_space<semaphore_mem>>) src(%370 : memref<1x128xf32, #tpu.memory_space<any>>) dst(%371 : memref<1x128xf32, #tpu.memory_space<vmem>>)
    %c1_120 = arith.constant 1 : index
    %374 = memref.load %arg0[%c1_120] : memref<8xi32, #tpu.memory_space<smem>>
    %c1_i32_121 = arith.constant 1 : i32
    %c0_i32_122 = arith.constant 0 : i32
    %375 = tpu.memref_slice %arg1[%374, %c0_i32_122] : memref<128x128xf32, #tpu.memory_space<any>> -> memref<1x128xf32, #tpu.memory_space<any>>
    %c1_i32_123 = arith.constant 1 : i32
    %c0_i32_124 = arith.constant 0 : i32
    %376 = tpu.memref_slice %arg4[%c1_i32_123, %c0_i32_124] : memref<8x128xf32, #tpu.memory_space<vmem>> -> memref<1x128xf32, #tpu.memory_space<vmem>>
    %377 = tpu.memref_slice %arg5[%c1_i32_121] : memref<8x!tpu.dma_semaphore, #tpu.memory_space<semaphore_mem>> -> memref<1x!tpu.dma_semaphore, #tpu.memory_space<semaphore_mem>>
    %378 = tpu.memref_squeeze %377 : memref<1x!tpu.dma_semaphore, #tpu.memory_space<semaphore_mem>> -> memref<!tpu.dma_semaphore, #tpu.memory_space<semaphore_mem>>
    tpu.wait_dma2 semaphore(%378 : memref<!tpu.dma_semaphore, #tpu.memory_space<semaphore_mem>>) src(%375 : memref<1x128xf32, #tpu.memory_space<any>>) dst(%376 : memref<1x128xf32, #tpu.memory_space<vmem>>)
    %c2_125 = arith.constant 2 : index
    %379 = memref.load %arg0[%c2_125] : memref<8xi32, #tpu.memory_space<smem>>
    %c2_i32_126 = arith.constant 2 : i32
    %c0_i32_127 = arith.constant 0 : i32
    %380 = tpu.memref_slice %arg1[%379, %c0_i32_127] : memref<128x128xf32, #tpu.memory_space<any>> -> memref<1x128xf32, #tpu.memory_space<any>>
    %c2_i32_128 = arith.constant 2 : i32
    %c0_i32_129 = arith.constant 0 : i32
    %381 = tpu.memref_slice %arg4[%c2_i32_128, %c0_i32_129] : memref<8x128xf32, #tpu.memory_space<vmem>> -> memref<1x128xf32, #tpu.memory_space<vmem>>
    %382 = tpu.memref_slice %arg5[%c2_i32_126] : memref<8x!tpu.dma_semaphore, #tpu.memory_space<semaphore_mem>> -> memref<1x!tpu.dma_semaphore, #tpu.memory_space<semaphore_mem>>
    %383 = tpu.memref_squeeze %382 : memref<1x!tpu.dma_semaphore, #tpu.memory_space<semaphore_mem>> -> memref<!tpu.dma_semaphore, #tpu.memory_space<semaphore_mem>>
    tpu.wait_dma2 semaphore(%383 : memref<!tpu.dma_semaphore, #tpu.memory_space<semaphore_mem>>) src(%380 : memref<1x128xf32, #tpu.memory_space<any>>) dst(%381 : memref<1x128xf32, #tpu.memory_space<vmem>>)
    %c3_130 = arith.constant 3 : index
    %384 = memref.load %arg0[%c3_130] : memref<8xi32, #tpu.memory_space<smem>>
    %c3_i32_131 = arith.constant 3 : i32
    %c0_i32_132 = arith.constant 0 : i32
    %385 = tpu.memref_slice %arg1[%384, %c0_i32_132] : memref<128x128xf32, #tpu.memory_space<any>> -> memref<1x128xf32, #tpu.memory_space<any>>
    %c3_i32_133 = arith.constant 3 : i32
    %c0_i32_134 = arith.constant 0 : i32
    %386 = tpu.memref_slice %arg4[%c3_i32_133, %c0_i32_134] : memref<8x128xf32, #tpu.memory_space<vmem>> -> memref<1x128xf32, #tpu.memory_space<vmem>>
    %387 = tpu.memref_slice %arg5[%c3_i32_131] : memref<8x!tpu.dma_semaphore, #tpu.memory_space<semaphore_mem>> -> memref<1x!tpu.dma_semaphore, #tpu.memory_space<semaphore_mem>>
    %388 = tpu.memref_squeeze %387 : memref<1x!tpu.dma_semaphore, #tpu.memory_space<semaphore_mem>> -> memref<!tpu.dma_semaphore, #tpu.memory_space<semaphore_mem>>
    tpu.wait_dma2 semaphore(%388 : memref<!tpu.dma_semaphore, #tpu.memory_space<semaphore_mem>>) src(%385 : memref<1x128xf32, #tpu.memory_space<any>>) dst(%386 : memref<1x128xf32, #tpu.memory_space<vmem>>)
    %c4_135 = arith.constant 4 : index
    %389 = memref.load %arg0[%c4_135] : memref<8xi32, #tpu.memory_space<smem>>
    %c4_i32_136 = arith.constant 4 : i32
    %c0_i32_137 = arith.constant 0 : i32
    %390 = tpu.memref_slice %arg1[%389, %c0_i32_137] : memref<128x128xf32, #tpu.memory_space<any>> -> memref<1x128xf32, #tpu.memory_space<any>>
    %c4_i32_138 = arith.constant 4 : i32
    %c0_i32_139 = arith.constant 0 : i32
    %391 = tpu.memref_slice %arg4[%c4_i32_138, %c0_i32_139] : memref<8x128xf32, #tpu.memory_space<vmem>> -> memref<1x128xf32, #tpu.memory_space<vmem>>
    %392 = tpu.memref_slice %arg5[%c4_i32_136] : memref<8x!tpu.dma_semaphore, #tpu.memory_space<semaphore_mem>> -> memref<1x!tpu.dma_semaphore, #tpu.memory_space<semaphore_mem>>
    %393 = tpu.memref_squeeze %392 : memref<1x!tpu.dma_semaphore, #tpu.memory_space<semaphore_mem>> -> memref<!tpu.dma_semaphore, #tpu.memory_space<semaphore_mem>>
    tpu.wait_dma2 semaphore(%393 : memref<!tpu.dma_semaphore, #tpu.memory_space<semaphore_mem>>) src(%390 : memref<1x128xf32, #tpu.memory_space<any>>) dst(%391 : memref<1x128xf32, #tpu.memory_space<vmem>>)
    %c5_140 = arith.constant 5 : index
    %394 = memref.load %arg0[%c5_140] : memref<8xi32, #tpu.memory_space<smem>>
    %c5_i32_141 = arith.constant 5 : i32
    %c0_i32_142 = arith.constant 0 : i32
    %395 = tpu.memref_slice %arg1[%394, %c0_i32_142] : memref<128x128xf32, #tpu.memory_space<any>> -> memref<1x128xf32, #tpu.memory_space<any>>
    %c5_i32_143 = arith.constant 5 : i32
    %c0_i32_144 = arith.constant 0 : i32
    %396 = tpu.memref_slice %arg4[%c5_i32_143, %c0_i32_144] : memref<8x128xf32, #tpu.memory_space<vmem>> -> memref<1x128xf32, #tpu.memory_space<vmem>>
    %397 = tpu.memref_slice %arg5[%c5_i32_141] : memref<8x!tpu.dma_semaphore, #tpu.memory_space<semaphore_mem>> -> memref<1x!tpu.dma_semaphore, #tpu.memory_space<semaphore_mem>>
    %398 = tpu.memref_squeeze %397 : memref<1x!tpu.dma_semaphore, #tpu.memory_space<semaphore_mem>> -> memref<!tpu.dma_semaphore, #tpu.memory_space<semaphore_mem>>
    tpu.wait_dma2 semaphore(%398 : memref<!tpu.dma_semaphore, #tpu.memory_space<semaphore_mem>>) src(%395 : memref<1x128xf32, #tpu.memory_space<any>>) dst(%396 : memref<1x128xf32, #tpu.memory_space<vmem>>)
    %c6_145 = arith.constant 6 : index
    %399 = memref.load %arg0[%c6_145] : memref<8xi32, #tpu.memory_space<smem>>
    %c6_i32_146 = arith.constant 6 : i32
    %c0_i32_147 = arith.constant 0 : i32
    %400 = tpu.memref_slice %arg1[%399, %c0_i32_147] : memref<128x128xf32, #tpu.memory_space<any>> -> memref<1x128xf32, #tpu.memory_space<any>>
    %c6_i32_148 = arith.constant 6 : i32
    %c0_i32_149 = arith.constant 0 : i32
    %401 = tpu.memref_slice %arg4[%c6_i32_148, %c0_i32_149] : memref<8x128xf32, #tpu.memory_space<vmem>> -> memref<1x128xf32, #tpu.memory_space<vmem>>
    %402 = tpu.memref_slice %arg5[%c6_i32_146] : memref<8x!tpu.dma_semaphore, #tpu.memory_space<semaphore_mem>> -> memref<1x!tpu.dma_semaphore, #tpu.memory_space<semaphore_mem>>
    %403 = tpu.memref_squeeze %402 : memref<1x!tpu.dma_semaphore, #tpu.memory_space<semaphore_mem>> -> memref<!tpu.dma_semaphore, #tpu.memory_space<semaphore_mem>>
    tpu.wait_dma2 semaphore(%403 : memref<!tpu.dma_semaphore, #tpu.memory_space<semaphore_mem>>) src(%400 : memref<1x128xf32, #tpu.memory_space<any>>) dst(%401 : memref<1x128xf32, #tpu.memory_space<vmem>>)
    %c7_150 = arith.constant 7 : index
    %404 = memref.load %arg0[%c7_150] : memref<8xi32, #tpu.memory_space<smem>>
    %c7_i32_151 = arith.constant 7 : i32
    %c0_i32_152 = arith.constant 0 : i32
    %405 = tpu.memref_slice %arg1[%404, %c0_i32_152] : memref<128x128xf32, #tpu.memory_space<any>> -> memref<1x128xf32, #tpu.memory_space<any>>
    %c7_i32_153 = arith.constant 7 : i32
    %c0_i32_154 = arith.constant 0 : i32
    %406 = tpu.memref_slice %arg4[%c7_i32_153, %c0_i32_154] : memref<8x128xf32, #tpu.memory_space<vmem>> -> memref<1x128xf32, #tpu.memory_space<vmem>>
    %407 = tpu.memref_slice %arg5[%c7_i32_151] : memref<8x!tpu.dma_semaphore, #tpu.memory_space<semaphore_mem>> -> memref<1x!tpu.dma_semaphore, #tpu.memory_space<semaphore_mem>>
    %408 = tpu.memref_squeeze %407 : memref<1x!tpu.dma_semaphore, #tpu.memory_space<semaphore_mem>> -> memref<!tpu.dma_semaphore, #tpu.memory_space<semaphore_mem>>
    tpu.wait_dma2 semaphore(%408 : memref<!tpu.dma_semaphore, #tpu.memory_space<semaphore_mem>>) src(%405 : memref<1x128xf32, #tpu.memory_space<any>>) dst(%406 : memref<1x128xf32, #tpu.memory_space<vmem>>)
    %c0_155 = arith.constant 0 : index
    %c0_156 = arith.constant 0 : index
    %409 = vector.load %arg4[%c0_155, %c0_156] : memref<8x128xf32, #tpu.memory_space<vmem>>, vector<8x128xf32>
    %410 = arith.mulf %409, %336 : vector<8x128xf32>
    %411 = vector.shape_cast %410 : vector<8x128xf32> to vector<1x8x128xf32>
    %cst_157 = arith.constant dense<0.000000e+00> : vector<1xf32>
    %412 = vector.multi_reduction <add>, %411, %cst_157 [1, 2] : vector<1x8x128xf32> to vector<1xf32>
    %413 = vector.shape_cast %412 : vector<1xf32> to vector<1x1x1xf32>
    %414 = vector.extract %413[0, 0, 0] : f32 from vector<1x1x1xf32>
    %cst_158 = arith.constant 0.000000e+00 : f32
    %415 = arith.subf %cst_158, %414 : f32
    %cst_159 = arith.constant 7.000000e+00 : f32
    %416 = arith.divf %415, %cst_159 : f32
    %c0_160 = arith.constant 0 : index
    %417 = memref.load %arg3[%c0_160] : memref<2xf32, #tpu.memory_space<smem>>
    memref.store %416, %arg3[%c0_160] : memref<2xf32, #tpu.memory_space<smem>>
    return
  }
}

</mosaic_0001>

<llo_original>
// kernel: tpu_custom_call.1
$region0: #{tpu_custom_call.1}
  #allocation0 [shape = 'u32[]', space=smem, size = 0x4, offset = 0x4, fixed_abs, tag = 'smem constant byte address 0x4 - core index']
  #allocation1 [shape = 'u32[144,128]{1,0:T(1,128)}', space=vmem, size = 0x12000, scoped, tag = 'internal scratch']
  #allocation2 [shape = 'f32[8,128]{1,0:T(8,128)}', space=vmem, size = 0x1000, scoped, tag = 'scratch operand']
  #allocation3 [shape = 's32[8]{0}', space=sflag, size = 0x20, scoped, tag = 'scratch operand']
  #allocation10 [shape = 's32[]', space=sflag, size = 0x4, offset = 0, fixed_abs, tag = 'sflag constant byte address 0x0 - dummy sync flag']
  #allocation11 [shape = 's32[]', space=sflag, size = 0x4, offset = 0, fixed_abs, tag = 'sflag constant byte address 0x0 - dummy sync flag']
  #allocation12 [shape = 'u32[]', space=smem, size = 0x4, offset = 0x44, fixed_abs, tag = 'smem constant byte address 0x44 - assertion arg 0']
  #allocation13 [shape = 'u32[]', space=smem, size = 0x4, offset = 0x48, fixed_abs, tag = 'smem constant byte address 0x48 - assertion arg 1']
  #allocation14 [shape = 's32[]', space=sflag, size = 0x4, offset = 0, fixed_abs, tag = 'sflag constant byte address 0x0 - dummy sync flag']
  #allocation15 [shape = 's32[]', space=sflag, size = 0x4, offset = 0, fixed_abs, tag = 'sflag constant byte address 0x0 - dummy sync flag']
  #allocation16 [shape = 's32[]', space=sflag, size = 0x4, offset = 0, fixed_abs, tag = 'sflag constant byte address 0x0 - dummy sync flag']
  #allocation17 [shape = 's32[]', space=sflag, size = 0x4, offset = 0, fixed_abs, tag = 'sflag constant byte address 0x0 - dummy sync flag']
  #allocation18 [shape = 's32[]', space=sflag, size = 0x4, offset = 0, fixed_abs, tag = 'sflag constant byte address 0x0 - dummy sync flag']
  #allocation19 [shape = 's32[]', space=sflag, size = 0x4, offset = 0, fixed_abs, tag = 'sflag constant byte address 0x0 - dummy sync flag']
  #allocation20 [shape = 's32[]', space=sflag, size = 0x4, offset = 0, fixed_abs, tag = 'sflag constant byte address 0x0 - dummy sync flag']
  #allocation21 [shape = 's32[]', space=sflag, size = 0x4, offset = 0, fixed_abs, tag = 'sflag constant byte address 0x0 - dummy sync flag']
  #allocation22 [shape = 's32[]', space=sflag, size = 0x4, offset = 0, fixed_abs, tag = 'sflag constant byte address 0x0 - dummy sync flag']
  #allocation23 [shape = 's32[]', space=sflag, size = 0x4, offset = 0, fixed_abs, tag = 'sflag constant byte address 0x0 - dummy sync flag']
  #allocation24 [shape = 's32[]', space=sflag, size = 0x4, offset = 0, fixed_abs, tag = 'sflag constant byte address 0x0 - dummy sync flag']
  #allocation25 [shape = 's32[]', space=sflag, size = 0x4, offset = 0, fixed_abs, tag = 'sflag constant byte address 0x0 - dummy sync flag']
  #allocation26 [shape = 's32[]', space=sflag, size = 0x4, offset = 0, fixed_abs, tag = 'sflag constant byte address 0x0 - dummy sync flag']
  #allocation27 [shape = 's32[]', space=sflag, size = 0x4, offset = 0, fixed_abs, tag = 'sflag constant byte address 0x0 - dummy sync flag']
  %s0 = inlined_call_operand.hbm [shape: s32[8], index: 0, kind: input, shape index: {}]
  %s1 = inlined_call_operand.hbm [shape: f32[128,128], index: 1, kind: input, shape index: {}]
  %s2 = inlined_call_operand.vmem [shape: f32[7], index: 2, kind: input, shape index: {}]
  %s3 = inlined_call_operand.hbm [shape: f32[2], index: 3, kind: output, shape index: {}]
  %s4 = sld [smem:[#allocation0]]
  $region58: #{tpu_custom_call.1} parent=0
    _
  %s6 = ssub.s32 1, %s4
  %s7 = scalar_select 0, %s6, %s4
  $region1: #{tpu_custom_call.1} parent=0
    #allocation4 [shape = 'u8[512]{0}', space=smem, size = 0x200, scoped, tag = 'input window, operand 0, single buffered']
    #allocation5 [shape = 's32[1]{0}', space=sflag, size = 0x4, scoped, tag = 'scoped memory for tpu_custom_call.1']
    #allocation6 [shape = 's32[1]{0}', space=sflag, size = 0x4, scoped, tag = 'scoped memory for tpu_custom_call.1']
    #allocation7 [shape = 's32[1]{0}', space=sflag, size = 0x4, scoped, tag = 'scoped memory for tpu_custom_call.1']
    #allocation8 [shape = 'u8[512]{0}', space=smem, size = 0x200, scoped, tag = 'input window, operand 2, single buffered']
    #allocation9 [shape = 'u8[512]{0}', space=smem, size = 0x200, scoped, tag = 'output window, operand 0, single buffered']
    %8 = vsyncpa [#allocation5], 0
    %9 = vsyncpa [#allocation7], 0
    %10 = vsyncpa [#allocation6], 0
    // Predicated region
    $region2: #{tpu_custom_call.1} parent=1 // pred_check
      _
    $region3: #{tpu_custom_call.1} parent=1 // pred_check_branch
      %12 = sbr.rel (0) target = $region5
    $region4: #{tpu_custom_call.1} parent=1 // pred_region
      %s14 = ssub.s32 16, 16
      %15 = vsyncadd [#allocation5], %s14
      %18 = dma.hbm_to_smem %s0, 16, [#allocation4], [#allocation5]
    $region5: #{tpu_custom_call.1} parent=1 // pred_fallthru
      _
    // Predicated region
    $region6: #{tpu_custom_call.1} parent=1 // pred_check
      _
    $region7: #{tpu_custom_call.1} parent=1 // pred_check_branch
      %20 = sbr.rel (0) target = $region9
    $region8: #{tpu_custom_call.1} parent=1 // pred_region
      %s22 = ssub.s32 16, 16
      %23 = vsyncadd [#allocation7], %s22
      %s25 = sshll.u32 %s2, 4
      %s26 = int_to_ptr.vmem [resolvable:$true] %s25
      %28 = dma.vmem_to_smem %s26, 16, [#allocation8], [#allocation7]
    $region9: #{tpu_custom_call.1} parent=1 // pred_fallthru
      _
    // Predicated region
    $region10: #{tpu_custom_call.1} parent=1 // pred_check
      _
    $region11: #{tpu_custom_call.1} parent=1 // pred_check_branch
      %30 = sbr.rel (0) target = $region13
    $region12: #{tpu_custom_call.1} parent=1 // pred_region
      %31 = dma.done [#allocation5], 16
    $region13: #{tpu_custom_call.1} parent=1 // pred_fallthru
      _
    // Predicated region
    $region14: #{tpu_custom_call.1} parent=1 // pred_check
      _
    $region15: #{tpu_custom_call.1} parent=1 // pred_check_branch
      %33 = sbr.rel (0) target = $region17
    $region16: #{tpu_custom_call.1} parent=1 // pred_region
      %34 = dma.done [#allocation7], 16
    $region17: #{tpu_custom_call.1} parent=1 // pred_fallthru
      _
    %35 = sfence
    %s36 = sld [smem:[#allocation4]]
    %s37 = smul.addr %s36, 16
    %s38 = scalar_lea.hbm %s1, %s37
    // Predicated region
    $region18: #{tpu_custom_call.1} parent=1 // pred_check
      _
    $region19: #{tpu_custom_call.1} parent=1 // pred_check_branch
      %40 = sbr.rel target = $region21
    $region20: #{tpu_custom_call.1} parent=1 // pred_region
      %41 = sst [smem:[#allocation12]] [#allocation11]
      %42 = sst [smem:[#allocation13]] [#allocation10]
    $region21: #{tpu_custom_call.1} parent=1 // pred_fallthru
      _
    %44 = shalt.err (0)
    %s46 = sshll.u32 [#allocation2], 4
    %s47 = int_to_ptr.vmem [resolvable:$true] %s46
    %49 = dma.hbm_to_vmem [thread:$0]  %s38, 16, %s47, [#allocation3]
    %s50 = sld [smem:[#allocation4 + $0x1]]
    %s51 = smul.addr %s50, 16
    %s52 = scalar_lea.hbm %s1, %s51
    %s53 = scalar_lea.vmem [#allocation2], 1
    %s54 = scalar_lea.sflag [#allocation3], 1
    // Predicated region
    $region22: #{tpu_custom_call.1} parent=1 // pred_check
      _
    $region23: #{tpu_custom_call.1} parent=1 // pred_check_branch
      %56 = sbr.rel target = $region25
    $region24: #{tpu_custom_call.1} parent=1 // pred_region
      %57 = sst [smem:[#allocation12]] [#allocation15]
      %58 = sst [smem:[#allocation13]] [#allocation14]
    $region25: #{tpu_custom_call.1} parent=1 // pred_fallthru
      _
    %60 = shalt.err (0)
    %s62 = sshll.u32 %s53, 4
    %s63 = int_to_ptr.vmem [resolvable:$true] %s62
    %65 = dma.hbm_to_vmem [thread:$0]  %s52, 16, %s63, %s54
    %s66 = sld [smem:[#allocation4 + $0x2]]
    %s67 = smul.addr %s66, 16
    %s68 = scalar_lea.hbm %s1, %s67
    %s69 = scalar_lea.vmem [#allocation2], 2
    %s70 = scalar_lea.sflag [#allocation3], 2
    // Predicated region
    $region26: #{tpu_custom_call.1} parent=1 // pred_check
      _
    $region27: #{tpu_custom_call.1} parent=1 // pred_check_branch
      %72 = sbr.rel target = $region29
    $region28: #{tpu_custom_call.1} parent=1 // pred_region
      %73 = sst [smem:[#allocation12]] [#allocation17]
      %74 = sst [smem:[#allocation13]] [#allocation16]
    $region29: #{tpu_custom_call.1} parent=1 // pred_fallthru
      _
    %76 = shalt.err (0)
    %s78 = sshll.u32 %s69, 4
    %s79 = int_to_ptr.vmem [resolvable:$true] %s78
    %81 = dma.hbm_to_vmem [thread:$0]  %s68, 16, %s79, %s70
    %s82 = sld [smem:[#allocation4 + $0x3]]
    %s83 = smul.addr %s82, 16
    %s84 = scalar_lea.hbm %s1, %s83
    %s85 = scalar_lea.vmem [#allocation2], 3
    %s86 = scalar_lea.sflag [#allocation3], 3
    // Predicated region
    $region30: #{tpu_custom_call.1} parent=1 // pred_check
      _
    $region31: #{tpu_custom_call.1} parent=1 // pred_check_branch
      %88 = sbr.rel target = $region33
    $region32: #{tpu_custom_call.1} parent=1 // pred_region
      %89 = sst [smem:[#allocation12]] [#allocation19]
      %90 = sst [smem:[#allocation13]] [#allocation18]
    $region33: #{tpu_custom_call.1} parent=1 // pred_fallthru
      _
    %92 = shalt.err (0)
    %s94 = sshll.u32 %s85, 4
    %s95 = int_to_ptr.vmem [resolvable:$true] %s94
    %97 = dma.hbm_to_vmem [thread:$0]  %s84, 16, %s95, %s86
    %s98 = sld [smem:[#allocation4 + $0x4]]
    %s99 = smul.addr %s98, 16
    %s100 = scalar_lea.hbm %s1, %s99
    %s101 = scalar_lea.vmem [#allocation2], 4
    %s102 = scalar_lea.sflag [#allocation3], 4
    // Predicated region
    $region34: #{tpu_custom_call.1} parent=1 // pred_check
      _
    $region35: #{tpu_custom_call.1} parent=1 // pred_check_branch
      %104 = sbr.rel target = $region37
    $region36: #{tpu_custom_call.1} parent=1 // pred_region
      %105 = sst [smem:[#allocation12]] [#allocation21]
      %106 = sst [smem:[#allocation13]] [#allocation20]
    $region37: #{tpu_custom_call.1} parent=1 // pred_fallthru
      _
    %108 = shalt.err (0)
    %s110 = sshll.u32 %s101, 4
    %s111 = int_to_ptr.vmem [resolvable:$true] %s110
    %113 = dma.hbm_to_vmem [thread:$0]  %s100, 16, %s111, %s102
    %s114 = sld [smem:[#allocation4 + $0x5]]
    %s115 = smul.addr %s114, 16
    %s116 = scalar_lea.hbm %s1, %s115
    %s117 = scalar_lea.vmem [#allocation2], 5
    %s118 = scalar_lea.sflag [#allocation3], 5
    // Predicated region
    $region38: #{tpu_custom_call.1} parent=1 // pred_check
      _
    $region39: #{tpu_custom_call.1} parent=1 // pred_check_branch
      %120 = sbr.rel target = $region41
    $region40: #{tpu_custom_call.1} parent=1 // pred_region
      %121 = sst [smem:[#allocation12]] [#allocation23]
      %122 = sst [smem:[#allocation13]] [#allocation22]
    $region41: #{tpu_custom_call.1} parent=1 // pred_fallthru
      _
    %124 = shalt.err (0)
    %s126 = sshll.u32 %s117, 4
    %s127 = int_to_ptr.vmem [resolvable:$true] %s126
    %129 = dma.hbm_to_vmem [thread:$0]  %s116, 16, %s127, %s118
    %s130 = sld [smem:[#allocation4 + $0x6]]
    %s131 = smul.addr %s130, 16
    %s132 = scalar_lea.hbm %s1, %s131
    %s133 = scalar_lea.vmem [#allocation2], 6
    %s134 = scalar_lea.sflag [#allocation3], 6
    // Predicated region
    $region42: #{tpu_custom_call.1} parent=1 // pred_check
      _
    $region43: #{tpu_custom_call.1} parent=1 // pred_check_branch
      %136 = sbr.rel target = $region45
    $region44: #{tpu_custom_call.1} parent=1 // pred_region
      %137 = sst [smem:[#allocation12]] [#allocation25]
      %138 = sst [smem:[#allocation13]] [#allocation24]
    $region45: #{tpu_custom_call.1} parent=1 // pred_fallthru
      _
    %140 = shalt.err (0)
    %s142 = sshll.u32 %s133, 4
    %s143 = int_to_ptr.vmem [resolvable:$true] %s142
    %145 = dma.hbm_to_vmem [thread:$0]  %s132, 16, %s143, %s134
    %s146 = sld [smem:[#allocation4 + $0x7]]
    %s147 = smul.addr %s146, 16
    %s148 = scalar_lea.hbm %s1, %s147
    %s149 = scalar_lea.vmem [#allocation2], 7
    %s150 = scalar_lea.sflag [#allocation3], 7
    // Predicated region
    $region46: #{tpu_custom_call.1} parent=1 // pred_check
      _
    $region47: #{tpu_custom_call.1} parent=1 // pred_check_branch
      %152 = sbr.rel target = $region49
    $region48: #{tpu_custom_call.1} parent=1 // pred_region
      %153 = sst [smem:[#allocation12]] [#allocation27]
      %154 = sst [smem:[#allocation13]] [#allocation26]
    $region49: #{tpu_custom_call.1} parent=1 // pred_fallthru
      _
    %156 = shalt.err (0)
    %s158 = sshll.u32 %s149, 4
    %s159 = int_to_ptr.vmem [resolvable:$true] %s158
    %161 = dma.hbm_to_vmem [thread:$0]  %s148, 16, %s159, %s150
    %v162 = vlaneseq
    %v163 = vand.u32 %v162, 127
    %v164 = vlaneseq
    %v165 = vshrl.u32 %v164, 7
    %s166 = sld [smem:[#allocation4]]
    %v167 = vstv %s166
    %vm168 = vcmp.eq.s32.totalorder %v163, %v167
    %v169 = vsel %vm168, 1, 0
    %v170 = vcvt.s32.f32 %v169
    %s171 = sld [smem:[#allocation8]]
    %vm172 = vcmp.eq.s32.totalorder %v165, 1
    %v173 = vsel %vm172, 1, 0
    %v174 = vcvt.s32.f32 %v173
    %v175 = vstv %s171
    %v176 = vmul.f32 %v175, %v174
    %v177 = vadd.f32 %v176, 0.0
    %s178 = sld [smem:[#allocation8 + $0x1]]
    %vm179 = vcmp.eq.s32.totalorder %v165, 2
    %v180 = vsel %vm179, 1, 0
    %v181 = vcvt.s32.f32 %v180
    %v182 = vstv %s178
    %v183 = vmul.f32 %v182, %v181
    %v184 = vadd.f32 %v177, %v183
    %s185 = sld [smem:[#allocation8 + $0x2]]
    %vm186 = vcmp.eq.s32.totalorder %v165, 3
    %v187 = vsel %vm186, 1, 0
    %v188 = vcvt.s32.f32 %v187
    %v189 = vstv %s185
    %v190 = vmul.f32 %v189, %v188
    %v191 = vadd.f32 %v184, %v190
    %s192 = sld [smem:[#allocation8 + $0x3]]
    %vm193 = vcmp.eq.s32.totalorder %v165, 4
    %v194 = vsel %vm193, 1, 0
    %v195 = vcvt.s32.f32 %v194
    %v196 = vstv %s192
    %v197 = vmul.f32 %v196, %v195
    %v198 = vadd.f32 %v191, %v197
    %s199 = sld [smem:[#allocation8 + $0x4]]
    %vm200 = vcmp.eq.s32.totalorder %v165, 5
    %v201 = vsel %vm200, 1, 0
    %v202 = vcvt.s32.f32 %v201
    %v203 = vstv %s199
    %v204 = vmul.f32 %v203, %v202
    %v205 = vadd.f32 %v198, %v204
    %s206 = sld [smem:[#allocation8 + $0x5]]
    %vm207 = vcmp.eq.s32.totalorder %v165, 6
    %v208 = vsel %vm207, 1, 0
    %v209 = vcvt.s32.f32 %v208
    %v210 = vstv %s206
    %v211 = vmul.f32 %v210, %v209
    %v212 = vadd.f32 %v205, %v211
    %s213 = sld [smem:[#allocation8 + $0x6]]
    %vm214 = vcmp.eq.s32.totalorder %v165, 7
    %v215 = vsel %vm214, 1, 0
    %v216 = vcvt.s32.f32 %v215
    %v217 = vstv %s213
    %v218 = vmul.f32 %v217, %v216
    %v219 = vadd.f32 %v212, %v218
    %v220 = vmul.f32 %v219, %v170
    %v221 = vadd.f32 %v220, 0.0
    %s222 = sld [smem:[#allocation4 + $0x1]]
    %v223 = vstv %s222
    %vm224 = vcmp.eq.s32.totalorder %v163, %v223
    %v225 = vsel %vm224, 1, 0
    %v226 = vcvt.s32.f32 %v225
    %v227 = vmul.f32 %v175, %v181
    %v228 = vadd.f32 %v227, 0.0
    %v229 = vmul.f32 %v182, %v188
    %v230 = vadd.f32 %v228, %v229
    %v231 = vmul.f32 %v189, %v195
    %v232 = vadd.f32 %v230, %v231
    %v233 = vmul.f32 %v196, %v202
    %v234 = vadd.f32 %v232, %v233
    %v235 = vmul.f32 %v203, %v209
    %v236 = vadd.f32 %v234, %v235
    %v237 = vmul.f32 %v210, %v216
    %v238 = vadd.f32 %v236, %v237
    %v239 = vmul.f32 %v238, %v226
    %v240 = vadd.f32 %v221, %v239
    %s241 = sld [smem:[#allocation4 + $0x2]]
    %v242 = vstv %s241
    %vm243 = vcmp.eq.s32.totalorder %v163, %v242
    %v244 = vsel %vm243, 1, 0
    %v245 = vcvt.s32.f32 %v244
    %v246 = vmul.f32 %v175, %v188
    %v247 = vadd.f32 %v246, 0.0
    %v248 = vmul.f32 %v182, %v195
    %v249 = vadd.f32 %v247, %v248
    %v250 = vmul.f32 %v189, %v202
    %v251 = vadd.f32 %v249, %v250
    %v252 = vmul.f32 %v196, %v209
    %v253 = vadd.f32 %v251, %v252
    %v254 = vmul.f32 %v203, %v216
    %v255 = vadd.f32 %v253, %v254
    %v256 = vmul.f32 %v255, %v245
    %v257 = vadd.f32 %v240, %v256
    %s258 = sld [smem:[#allocation4 + $0x3]]
    %v259 = vstv %s258
    %vm260 = vcmp.eq.s32.totalorder %v163, %v259
    %v261 = vsel %vm260, 1, 0
    %v262 = vcvt.s32.f32 %v261
    %v263 = vmul.f32 %v175, %v195
    %v264 = vadd.f32 %v263, 0.0
    %v265 = vmul.f32 %v182, %v202
    %v266 = vadd.f32 %v264, %v265
    %v267 = vmul.f32 %v189, %v209
    %v268 = vadd.f32 %v266, %v267
    %v269 = vmul.f32 %v196, %v216
    %v270 = vadd.f32 %v268, %v269
    %v271 = vmul.f32 %v270, %v262
    %v272 = vadd.f32 %v257, %v271
    %s273 = sld [smem:[#allocation4 + $0x4]]
    %v274 = vstv %s273
    %vm275 = vcmp.eq.s32.totalorder %v163, %v274
    %v276 = vsel %vm275, 1, 0
    %v277 = vcvt.s32.f32 %v276
    %v278 = vmul.f32 %v175, %v202
    %v279 = vadd.f32 %v278, 0.0
    %v280 = vmul.f32 %v182, %v209
    %v281 = vadd.f32 %v279, %v280
    %v282 = vmul.f32 %v189, %v216
    %v283 = vadd.f32 %v281, %v282
    %v284 = vmul.f32 %v283, %v277
    %v285 = vadd.f32 %v272, %v284
    %s286 = sld [smem:[#allocation4 + $0x5]]
    %v287 = vstv %s286
    %vm288 = vcmp.eq.s32.totalorder %v163, %v287
    %v289 = vsel %vm288, 1, 0
    %v290 = vcvt.s32.f32 %v289
    %v291 = vmul.f32 %v175, %v209
    %v292 = vadd.f32 %v291, 0.0
    %v293 = vmul.f32 %v182, %v216
    %v294 = vadd.f32 %v292, %v293
    %v295 = vmul.f32 %v294, %v290
    %v296 = vadd.f32 %v285, %v295
    %s297 = sld [smem:[#allocation4 + $0x6]]
    %v298 = vstv %s297
    %vm299 = vcmp.eq.s32.totalorder %v163, %v298
    %v300 = vsel %vm299, 1, 0
    %v301 = vcvt.s32.f32 %v300
    %v302 = vmul.f32 %v175, %v216
    %v303 = vadd.f32 %v302, 0.0
    %v304 = vmul.f32 %v303, %v301
    %v305 = vadd.f32 %v296, %v304
    %s306 = ssub.f32 %s171, %s178
    %s307 = smin.f32 %s306, 0.0
    %s308 = sadd.f32 %s307, 0.0
    %s309 = ssub.f32 %s178, %s185
    %s310 = smin.f32 %s309, 0.0
    %s311 = sadd.f32 %s308, %s310
    %s312 = ssub.f32 %s185, %s192
    %s313 = smin.f32 %s312, 0.0
    %s314 = sadd.f32 %s311, %s313
    %s315 = ssub.f32 %s192, %s199
    %s316 = smin.f32 %s315, 0.0
    %s317 = sadd.f32 %s314, %s316
    %s318 = ssub.f32 %s199, %s206
    %s319 = smin.f32 %s318, 0.0
    %s320 = sadd.f32 %s317, %s319
    %s321 = ssub.f32 %s206, %s213
    %s322 = smin.f32 %s321, 0.0
    %s323 = sadd.f32 %s320, %s322
    %s324 = smul.f32 %s323, -5.0
    %s325 = scalar_lea.smem [#allocation9], 1
    %326 = sst [smem:[%s325]] %s324
    %s327 = sld [smem:[#allocation4]]
    %s328 = smul.u32 1, 1
    %s329 = sshll.u32 %s328, 4
    %330 = dma.done [#allocation3], %s329
    %s331 = sld [smem:[#allocation4 + $0x1]]
    %s332 = sshll.u32 %s328, 4
    %333 = dma.done %s54, %s332
    %s334 = sld [smem:[#allocation4 + $0x2]]
    %s335 = sshll.u32 %s328, 4
    %336 = dma.done %s70, %s335
    %s337 = sld [smem:[#allocation4 + $0x3]]
    %s338 = sshll.u32 %s328, 4
    %339 = dma.done %s86, %s338
    %s340 = sld [smem:[#allocation4 + $0x4]]
    %s341 = sshll.u32 %s328, 4
    %342 = dma.done %s102, %s341
    %s343 = sld [smem:[#allocation4 + $0x5]]
    %s344 = sshll.u32 %s328, 4
    %345 = dma.done %s118, %s344
    %s346 = sld [smem:[#allocation4 + $0x6]]
    %s347 = sshll.u32 %s328, 4
    %348 = dma.done %s134, %s347
    %s349 = sld [smem:[#allocation4 + $0x7]]
    %s350 = sshll.u32 %s328, 4
    %351 = dma.done %s150, %s350
    %v352 = vld [vmem:[#allocation2] sm:$0xff]
    %v353 = vmul.f32 %v352, %v305
    %354 = vadd.xlane.f32.xlu0 %v353
    %v355 = vpop.xlane.xlu0 %354
    %v356 = vrot.slane %v355, 4
    %v357 = vadd.f32 %v355, %v356
    %v358 = vrot.slane %v357, 2
    %v359 = vadd.f32 %v357, %v358
    %v360 = vrot.slane %v359, 1
    %v361 = vadd.f32 %v359, %v360
    %s362 = vtos %v361
    %s363 = ssub.f32 0.0, %s362
    %v364 = vrcp.pop 7.0
    %s365 = vtos %v364
    %s366 = smul.f32 %s363, %s365
    %s367 = scalar_lea.smem [#allocation9], 0
    %368 = sst [smem:[%s367]] %s366
    // Predicated region
    $region50: #{tpu_custom_call.1} parent=1 // pred_check
      _
    $region51: #{tpu_custom_call.1} parent=1 // pred_check_branch
      %370 = sbr.rel (0) target = $region53
    $region52: #{tpu_custom_call.1} parent=1 // pred_region
      %s372 = ssub.s32 16, 16
      %373 = vsyncadd [#allocation6], %s372
      %376 = dma.smem_to_hbm [#allocation9], 16, %s3, [#allocation6]
    $region53: #{tpu_custom_call.1} parent=1 // pred_fallthru
      _
    // Predicated region
    $region54: #{tpu_custom_call.1} parent=1 // pred_check
      _
    $region55: #{tpu_custom_call.1} parent=1 // pred_check_branch
      %378 = sbr.rel (0) target = $region57
    $region56: #{tpu_custom_call.1} parent=1 // pred_region
      %379 = dma.done [#allocation6], 16
    $region57: #{tpu_custom_call.1} parent=1 // pred_fallthru
      _
    %380 = sfence
    %381 = vsyncpa [#allocation5], 1
    %382 = vsyncpa [#allocation6], 1
    %383 = vsyncpa [#allocation7], 1
  %384 = vsyncmov [#allocation3]
  %s385 = vpop.sfrf %384
  %p386 = scmp.eq.s32.totalorder %s385, 0
  %p387 = pneg %p386
  %389 = shalt.err (%p387)
  %s390 = scalar_lea.sflag [#allocation3], 1
  %391 = vsyncmov %s390
  %s392 = vpop.sfrf %391
  %p393 = scmp.eq.s32.totalorder %s392, 0
  %p394 = pneg %p393
  %396 = shalt.err (%p394)
  %s397 = scalar_lea.sflag [#allocation3], 2
  %398 = vsyncmov %s397
  %s399 = vpop.sfrf %398
  %p400 = scmp.eq.s32.totalorder %s399, 0
  %p401 = pneg %p400
  %403 = shalt.err (%p401)
  %s404 = scalar_lea.sflag [#allocation3], 3
  %405 = vsyncmov %s404
  %s406 = vpop.sfrf %405
  %p407 = scmp.eq.s32.totalorder %s406, 0
  %p408 = pneg %p407
  %410 = shalt.err (%p408)
  %s411 = scalar_lea.sflag [#allocation3], 4
  %412 = vsyncmov %s411
  %s413 = vpop.sfrf %412
  %p414 = scmp.eq.s32.totalorder %s413, 0
  %p415 = pneg %p414
  %417 = shalt.err (%p415)
  %s418 = scalar_lea.sflag [#allocation3], 5
  %419 = vsyncmov %s418
  %s420 = vpop.sfrf %419
  %p421 = scmp.eq.s32.totalorder %s420, 0
  %p422 = pneg %p421
  %424 = shalt.err (%p422)
  %s425 = scalar_lea.sflag [#allocation3], 6
  %426 = vsyncmov %s425
  %s427 = vpop.sfrf %426
  %p428 = scmp.eq.s32.totalorder %s427, 0
  %p429 = pneg %p428
  %431 = shalt.err (%p429)
  %s432 = scalar_lea.sflag [#allocation3], 7
  %433 = vsyncmov %s432
  %s434 = vpop.sfrf %433
  %p435 = scmp.eq.s32.totalorder %s434, 0
  %p436 = pneg %p435
  %438 = shalt.err (%p436)

</llo_original>
